<compile_context>
chip_gen: v5e
topology: v5e:2x2
jax: 0.10.0
libtpu: 0.0.40
codegen_flags: <defaults>
</compile_context>

<pallas_src>
import functools

import jax
import jax.numpy as jnp
from jax.experimental import pallas as pl
from jax.experimental.pallas import tpu as pltpu


def _rope_kernel(pos_ref, invf_ref, cos_ref, sin_ref, *, attention_scaling):
    # pos_ref : (tile, 1)        float32
    # invf_ref: (1, half_dim)    float32
    # cos_ref / sin_ref : (tile, 2*half_dim) in output dtype
    pos = pos_ref[...]                       # (tile, 1)
    invf = invf_ref[...]                     # (1, half_dim)
    freqs = pos * invf                       # (tile, half_dim) rank-1 broadcast (VPU)

    cos_h = jnp.cos(freqs)                   # half-width transcendentals only
    sin_h = jnp.sin(freqs)
    if attention_scaling != 1.0:             # trace-time constant; skipped for default rope
        cos_h = cos_h * attention_scaling
        sin_h = sin_h * attention_scaling

    # Lane-concat (XLU) to full width, then a single unmasked lane-dense store.
    cos_ref[...] = jnp.concatenate([cos_h, cos_h], axis=-1).astype(cos_ref.dtype)
    sin_ref[...] = jnp.concatenate([sin_h, sin_h], axis=-1).astype(sin_ref.dtype)


def _round_up(a, b):
    return ((a + b - 1) // b) * b


def qwen2_rotary_embedding(x, position_ids, inv_freq, attention_scaling=1.0,
                           tile_rows=8192):
    """Pallas equivalent of Qwen2RotaryEmbedding.forward (default rope_type).

    Note: position_ids are cast to float32 (loses integer precision above 2^24),
    matching the PyTorch .float() behavior.
    """
    B, S = position_ids.shape
    half_dim = inv_freq.shape[0]
    dim = 2 * half_dim
    rows = B * S

    # Tile: multiple of 8 (sublane), at most tile_rows, and small enough that the
    # grid has >= 2 steps whenever rows allows it (v7x megacore sharding).
    tile = min(int(tile_rows), _round_up(rows, 8))
    two_step_cap = _round_up(pl.cdiv(rows, 2), 8)
    tile = max(8, min(tile, two_step_cap))
    tile = _round_up(tile, 8)
    grid = pl.cdiv(rows, tile)

    # Glue (matches torch .float()); no padding -- Pallas masks the ragged last block.
    pos = position_ids.astype(jnp.float32).reshape(rows, 1)
    invf = inv_freq.astype(jnp.float32).reshape(1, half_dim)

    kernel = functools.partial(_rope_kernel,
                               attention_scaling=float(attention_scaling))

    out_shape = (
        jax.ShapeDtypeStruct((rows, dim), x.dtype),
        jax.ShapeDtypeStruct((rows, dim), x.dtype),
    )

    # TODO(synk): for dim < 128 the output block uses only dim of 128 lanes; a
    # row-packing layout (r = 128 // dim rows per lane group) would recover full
    # lane density, but Qwen2's usual head_dim is 128 so it is not implemented.
    cos2d, sin2d = pl.pallas_call(
        kernel,
        grid=(grid,),
        in_specs=[
            pl.BlockSpec((tile, 1), lambda i: (i, 0)),
            pl.BlockSpec((1, half_dim), lambda i: (0, 0)),
        ],
        out_specs=(
            pl.BlockSpec((tile, dim), lambda i: (i, 0)),
            pl.BlockSpec((tile, dim), lambda i: (i, 0)),
        ),
        out_shape=out_shape,
        compiler_params=pltpu.CompilerParams(
            dimension_semantics=("parallel",)),
    )(pos, invf)

    cos = cos2d.reshape(B, S, dim)
    sin = sin2d.reshape(B, S, dim)
    return cos, sin


def _default_rope_init(dim, base=10000.0):
    """ROPE_INIT_FUNCTIONS['default'] equivalent: (inv_freq, attention_scaling)."""
    inv_freq = 1.0 / (base ** (jnp.arange(0, dim, 2, dtype=jnp.float32) / dim))
    attention_scaling = 1.0
    return inv_freq, attention_scaling


# TODO(synk): the 'dynamic' rope_type path (_dynamic_frequency_update) is host-side
# buffer-cache logic with no kernel equivalent; only the default forward is implemented.


if __name__ == "__main__":
    key = jax.random.PRNGKey(0)

    B, S, H = 2, 8, 32       # batch, seq, hidden (hidden only supplies dtype of x)
    dim = 128                # rotary head dim (Qwen2 head_dim)
    base = 10000.0

    inv_freq, attention_scaling = _default_rope_init(dim, base)

    kx, _ = jax.random.split(key)
    x = jax.random.normal(kx, (B, S, H), dtype=jnp.float32).astype(jnp.bfloat16)
    position_ids = jnp.broadcast_to(jnp.arange(S, dtype=jnp.int32), (B, S))

    cos, sin = qwen2_rotary_embedding(x, position_ids, inv_freq, attention_scaling)
    cos = jax.block_until_ready(cos)
    sin = jax.block_until_ready(sin)

    # Plain-JAX reference (same math as the torch forward).
    freqs_ref = position_ids.astype(jnp.float32)[:, :, None] * inv_freq[None, None, :]
    emb_ref = jnp.concatenate([freqs_ref, freqs_ref], axis=-1)
    cos_ref = (jnp.cos(emb_ref) * attention_scaling).astype(x.dtype)
    sin_ref = (jnp.sin(emb_ref) * attention_scaling).astype(x.dtype)

    assert cos.shape == (B, S, dim) and sin.shape == (B, S, dim)
    assert cos.dtype == x.dtype and sin.dtype == x.dtype
    assert jnp.allclose(cos.astype(jnp.float32), cos_ref.astype(jnp.float32), atol=1e-2)
    assert jnp.allclose(sin.astype(jnp.float32), sin_ref.astype(jnp.float32), atol=1e-2)

    print("KERNEL_OK")
</pallas_src>

<mosaic_0001>
module attributes {stable_mosaic.version = 11 : i64} {
  func.func @_rope_kernel(%arg0: i32, %arg1: memref<8x1xf32, #tpu.memory_space<vmem>>, %arg2: memref<1x64xf32, #tpu.memory_space<vmem>>, %arg3: memref<8x128xbf16, #tpu.memory_space<vmem>>, %arg4: memref<8x128xbf16, #tpu.memory_space<vmem>>) attributes {dimension_semantics = [#tpu.dimension_semantics<parallel>], iteration_bounds = array<i64: 2>, scalar_prefetch = 0 : i64, scratch_operands = 0 : i64, tpu.core_type = #tpu.core_type<tc>, window_params = [{transform_indices = @transform_0, window_bounds = array<i64: 8, 1>}, {pipeline_mode = #tpu.pipeline_mode<synchronous>, transform_indices = @transform_1, window_bounds = array<i64: 1, 64>}, {transform_indices = @transform_2, window_bounds = array<i64: 8, 128>}, {transform_indices = @transform_3, window_bounds = array<i64: 8, 128>}]} {
    %c0 = arith.constant 0 : index
    %c0_0 = arith.constant 0 : index
    %0 = vector.load %arg1[%c0, %c0_0] : memref<8x1xf32, #tpu.memory_space<vmem>>, vector<8x1xf32>
    %c0_1 = arith.constant 0 : index
    %c0_2 = arith.constant 0 : index
    %1 = vector.load %arg2[%c0_1, %c0_2] : memref<1x64xf32, #tpu.memory_space<vmem>>, vector<1x64xf32>
    %2 = vector.broadcast %0 : vector<8x1xf32> to vector<8x64xf32>
    %3 = vector.broadcast %1 : vector<1x64xf32> to vector<8x64xf32>
    %4 = arith.mulf %2, %3 : vector<8x64xf32>
    %5 = math.cos %4 : vector<8x64xf32>
    %6 = math.sin %4 : vector<8x64xf32>
    %7 = tpu.concatenate %5, %5 in 1 : vector<8x64xf32>, vector<8x64xf32> -> vector<8x128xf32>
    %8 = arith.truncf %7 : vector<8x128xf32> to vector<8x128xbf16>
    %c0_3 = arith.constant 0 : index
    %c0_4 = arith.constant 0 : index
    %9 = vector.load %arg3[%c0_3, %c0_4] : memref<8x128xbf16, #tpu.memory_space<vmem>>, vector<8x128xbf16>
    tpu.vector_store %arg3[%c0_3, %c0_4], %8 {strides = array<i32>} : memref<8x128xbf16, #tpu.memory_space<vmem>>, vector<8x128xbf16>,
    %10 = tpu.concatenate %6, %6 in 1 : vector<8x64xf32>, vector<8x64xf32> -> vector<8x128xf32>
    %11 = arith.truncf %10 : vector<8x128xf32> to vector<8x128xbf16>
    %c0_5 = arith.constant 0 : index
    %c0_6 = arith.constant 0 : index
    %12 = vector.load %arg4[%c0_5, %c0_6] : memref<8x128xbf16, #tpu.memory_space<vmem>>, vector<8x128xbf16>
    tpu.vector_store %arg4[%c0_5, %c0_6], %11 {strides = array<i32>} : memref<8x128xbf16, #tpu.memory_space<vmem>>, vector<8x128xbf16>,
    return
  }
  func.func @transform_0(%arg0: i32) -> (i32, i32) {
    %c0_i32 = arith.constant 0 : i32
    %c0_i32_0 = arith.constant 0 : i32
    return %arg0, %c0_i32 : i32, i32
  }
  func.func @transform_1(%arg0: i32) -> (i32, i32) {
    %c0_i32 = arith.constant 0 : i32
    %c0_i32_0 = arith.constant 0 : i32
    %c0_i32_1 = arith.constant 0 : i32
    return %c0_i32, %c0_i32_0 : i32, i32
  }
  func.func @transform_2(%arg0: i32) -> (i32, i32) {
    %c0_i32 = arith.constant 0 : i32
    %c0_i32_0 = arith.constant 0 : i32
    return %arg0, %c0_i32 : i32, i32
  }
  func.func @transform_3(%arg0: i32) -> (i32, i32) {
    %c0_i32 = arith.constant 0 : i32
    %c0_i32_0 = arith.constant 0 : i32
    return %arg0, %c0_i32 : i32, i32
  }
}

</mosaic_0001>

<llo_original>
// kernel: tpu_custom_call.1
$region0: #{tpu_custom_call.1}
  #allocation0 [shape = 'u32[]', space=smem, size = 0x4, offset = 0x4, fixed_abs, tag = 'smem constant byte address 0x4 - core index']
  #allocation1 [shape = 'u32[72,128]{1,0:T(1,128)}', space=vmem, size = 0x9000, scoped, tag = 'internal scratch']
  %s0 = inlined_call_operand.vmem [shape: f32[16,1], index: 0, kind: input, shape index: {}]
  %s1 = inlined_call_operand.vmem [shape: f32[1,64], index: 1, kind: input, shape index: {}]
  %s2 = inlined_call_operand.hbm [shape: bf16[16,128], index: 2, kind: output, shape index: {0}]
  %s3 = inlined_call_operand.hbm [shape: bf16[16,128], index: 3, kind: output, shape index: {1}]
  %4 = xla_tuple %s2, %s3
  %s5 = sld [smem:[#allocation0]]
  $region49: #{tpu_custom_call.1} parent=0
    _
  %s7 = ssub.s32 1, %s5
  %s8 = scalar_select 0, %s7, %s5
  $region1: #{tpu_custom_call.1} parent=0
    #allocation2 [shape = 'u8[4096]{0}', space=vmem, size = 0x1000, scoped, tag = 'output window, operand 0']
    #allocation3 [shape = 's32[2]{0}', space=sflag, size = 0x8, scoped, tag = 'scoped memory for tpu_custom_call.1']
    #allocation4 [shape = 'u8[4096]{0}', space=vmem, size = 0x1000, scoped, tag = 'output window, operand 1']
    #allocation5 [shape = 's32[2]{0}', space=sflag, size = 0x8, scoped, tag = 'scoped memory for tpu_custom_call.1']
    %9 = vsyncpa [#allocation3], 0
    %s10 = scalar_lea.sflag [#allocation3], 1
    %11 = vsyncpa %s10, 0
    %12 = vsyncpa [#allocation5], 0
    %s13 = scalar_lea.sflag [#allocation5], 1
    %14 = vsyncpa %s13, 0
    loop: start=0, step=1, limit=4
    $region2: #{tpu_custom_call.1} parent=1 // loop_pre_header
      _
    $region3: #{tpu_custom_call.1} parent=1 // loop_header
      %s16 = sphi 0, %s20
      %p17 = scmp.ge.s32.totalorder %s16, 4
      %s26 = sphi 0, %s28
      %s29 = sphi 0, %s26
      %s30 = sphi 0, %s29
      %s46 = sphi 0, %s30
      %s50 = sphi 0, %s50
      %s52 = sphi 0, %s50
      %s53 = sphi 0, %s52
      %s67 = sphi 0, %s53
      %s73 = sphi 0, %s75
      %s76 = sphi 0, %s73
      %s77 = sphi 0, %s76
      %s93 = sphi 0, %s77
      %s99 = sphi 0, %s101
      %s102 = sphi 0, %s99
      %s103 = sphi 0, %s102
      %s119 = sphi 0, %s103
    $region4: #{tpu_custom_call.1} parent=1 // loop_header_branch
      %19 = sbr.rel (%p17) target = $region8
    $region5: #{tpu_custom_call.1} parent=1 // loop_body
      %s21 = ssub.s32 %s16, 1
      %s22 = ssub.s32 %s16, 2
      %s23 = sadd.s32 %s16, 1
      %s24 = ssub.s32 %s16, %s23
      %p25 = scmp.eq.s32.totalorder %s24, 0
      %s27 = sadd.s32 %s26, 1
      %s28 = scalar_select %p25, %s26, %s27
      %p31 = pneg %p25
      %p32 = scmp.eq.s32.totalorder %s16, 1
      %p33 = por %p31, %p32
      %p34 = scmp.ne.s32.totalorder %s26, %s29
      %p35 = scmp.eq.s32.totalorder %s16, 0
      %p36 = por %p34, %p35
      %p37 = scmp.ne.s32.totalorder %s26, %s29
      %p38 = scmp.eq.s32.totalorder %s21, 1
      %p39 = por %p37, %p38
      %p40 = scmp.ne.s32.totalorder %s29, %s30
      %p41 = scmp.eq.s32.totalorder %s21, 0
      %p42 = por %p40, %p41
      %p43 = scmp.ne.s32.totalorder %s29, %s30
      %p44 = scmp.eq.s32.totalorder %s22, 1
      %p45 = por %p43, %p44
      %p47 = scmp.ne.s32.totalorder %s30, %s46
      %p48 = scmp.eq.s32.totalorder %s22, 0
      %p49 = por %p47, %p48
      %s51 = sadd.s32 %s50, 1
      %p54 = scmp.eq.s32.totalorder %s16, 1
      %p55 = scmp.ne.s32.totalorder %s50, %s52
      %p56 = scmp.eq.s32.totalorder %s16, 0
      %p57 = por %p55, %p56
      %p58 = scmp.ne.s32.totalorder %s50, %s52
      %p59 = scmp.eq.s32.totalorder %s21, 1
      %p60 = por %p58, %p59
      %p61 = scmp.ne.s32.totalorder %s52, %s53
      %p62 = scmp.eq.s32.totalorder %s21, 0
      %p63 = por %p61, %p62
      %p64 = scmp.ne.s32.totalorder %s52, %s53
      %p65 = scmp.eq.s32.totalorder %s22, 1
      %p66 = por %p64, %p65
      %p68 = scmp.ne.s32.totalorder %s53, %s67
      %p69 = scmp.eq.s32.totalorder %s22, 0
      %p70 = por %p68, %p69
      %s71 = ssub.s32 %s16, %s23
      %p72 = scmp.eq.s32.totalorder %s71, 0
      %s74 = sadd.s32 %s73, 1
      %s75 = scalar_select %p72, %s73, %s74
      %p78 = pneg %p72
      %p79 = scmp.eq.s32.totalorder %s16, 1
      %p80 = por %p78, %p79
      %p81 = scmp.ne.s32.totalorder %s73, %s76
      %p82 = scmp.eq.s32.totalorder %s16, 0
      %p83 = por %p81, %p82
      %p84 = scmp.ne.s32.totalorder %s73, %s76
      %p85 = scmp.eq.s32.totalorder %s21, 1
      %p86 = por %p84, %p85
      %p87 = scmp.ne.s32.totalorder %s76, %s77
      %p88 = scmp.eq.s32.totalorder %s21, 0
      %p89 = por %p87, %p88
      %p90 = scmp.ne.s32.totalorder %s76, %s77
      %p91 = scmp.eq.s32.totalorder %s22, 1
      %p92 = por %p90, %p91
      %p94 = scmp.ne.s32.totalorder %s77, %s93
      %p95 = scmp.eq.s32.totalorder %s22, 0
      %p96 = por %p94, %p95
      %s97 = ssub.s32 %s16, %s23
      %p98 = scmp.eq.s32.totalorder %s97, 0
      %s100 = sadd.s32 %s99, 1
      %s101 = scalar_select %p98, %s99, %s100
      %p104 = pneg %p98
      %p105 = scmp.eq.s32.totalorder %s16, 1
      %p106 = por %p104, %p105
      %p107 = scmp.ne.s32.totalorder %s99, %s102
      %p108 = scmp.eq.s32.totalorder %s16, 0
      %p109 = por %p107, %p108
      %p110 = scmp.ne.s32.totalorder %s99, %s102
      %p111 = scmp.eq.s32.totalorder %s21, 1
      %p112 = por %p110, %p111
      %p113 = scmp.ne.s32.totalorder %s102, %s103
      %p114 = scmp.eq.s32.totalorder %s21, 0
      %p115 = por %p113, %p114
      %p116 = scmp.ne.s32.totalorder %s102, %s103
      %p117 = scmp.eq.s32.totalorder %s22, 1
      %p118 = por %p116, %p117
      %p120 = scmp.ne.s32.totalorder %s103, %s119
      %p121 = scmp.eq.s32.totalorder %s22, 0
      %p122 = por %p120, %p121
      %p123 = scmp.le.s32.totalorder 1, %s16
      %p124 = scmp.lt.s32.totalorder %s16, 3
      %p125 = pnand %p123, %p124
      %p126 = pneg %p125
      // Predicated region
      $region9: #{tpu_custom_call.1} parent=5 // pred_check
        _
      $region10: #{tpu_custom_call.1} parent=5 // pred_check_branch
        %128 = sbr.rel (%p125) target = $region12
      $region11: #{tpu_custom_call.1} parent=5 // pred_region
        %s129 = ssub.s32 %s16, 1
        // Predicated region
        $region13: #{tpu_custom_call.1} parent=11 // pred_check
          %p130 = pneg %p63
        $region14: #{tpu_custom_call.1} parent=11 // pred_check_branch
          %132 = sbr.rel (%p130) target = $region16
        $region15: #{tpu_custom_call.1} parent=11 // pred_region
          _
        $region16: #{tpu_custom_call.1} parent=11 // pred_fallthru
          _
      $region12: #{tpu_custom_call.1} parent=5 // pred_fallthru
        _
      %p133 = scmp.lt.s32.totalorder %s16, 2
      // Predicated region
      $region17: #{tpu_custom_call.1} parent=5 // pred_check
        %p134 = pneg %p133
      $region18: #{tpu_custom_call.1} parent=5 // pred_check_branch
        %136 = sbr.rel (%p134) target = $region20
      $region19: #{tpu_custom_call.1} parent=5 // pred_region
        // Predicated region
        $region21: #{tpu_custom_call.1} parent=19 // pred_check
          %p137 = pneg %p36
        $region22: #{tpu_custom_call.1} parent=19 // pred_check_branch
          %139 = sbr.rel (%p137) target = $region24
        $region23: #{tpu_custom_call.1} parent=19 // pred_region
          %p140 = scmp.lt.s32.totalorder %s16, 1
          %s141 = scalar_select %p140, %s16, 1
          %s142 = smul.addr %s141, 8
          %s143 = scalar_lea.vmem %s0, %s142
        $region24: #{tpu_custom_call.1} parent=19 // pred_fallthru
          _
      $region20: #{tpu_custom_call.1} parent=5 // pred_fallthru
        _
      %p144 = scmp.le.s32.totalorder 1, %s16
      %p145 = scmp.lt.s32.totalorder %s16, 3
      %p146 = pnand %p144, %p145
      %p147 = pneg %p146
      // Predicated region
      $region25: #{tpu_custom_call.1} parent=5 // pred_check
        _
      $region26: #{tpu_custom_call.1} parent=5 // pred_check_branch
        %149 = sbr.rel (%p146) target = $region28
      $region27: #{tpu_custom_call.1} parent=5 // pred_region
        %s150 = ssub.s32 %s16, 1
        %p151 = scmp.lt.s32.totalorder %s21, 1
        %s152 = scalar_select %p151, %s21, 1
        %s153 = smul.addr %s152, 8
        %s154 = scalar_lea.vmem %s0, %s153
        %p155 = pneg %p42
        %p156 = pneg %p39
        %p157 = pneg %p63
        %p158 = pneg %p60
        %p159 = pneg %p89
        %p160 = pneg %p86
        %s161 = sand.u32 %s76, 1
        %s162 = scalar_lea.sflag [#allocation3], %s161
        %s163 = sand.u32 %s76, 1
        %s164 = smul.addr %s163, 4
        %s165 = scalar_lea.vmem [#allocation2], %s164
        %p166 = pneg %p115
        %p167 = pneg %p112
        %s168 = sand.u32 %s102, 1
        %s169 = scalar_lea.sflag [#allocation5], %s168
        %s170 = sand.u32 %s102, 1
        %s171 = smul.addr %s170, 4
        %s172 = scalar_lea.vmem [#allocation4], %s171
        %p173 = scmp.lt.s32.totalorder %s21, 1
        %s174 = scalar_select %p173, %s21, 1
        %s175 = smul.addr %s174, 8
        %s176 = scalar_lea.vmem %s0, %s175
        %v177 = vld [vmem:[%s176] sm:$0xff]
        %v178 = vld [vmem:[%s1] sm:$0x1]
        %180 = vset.pattern.permute.xlu0 0
        %181 = vperm.xlu0 %180, %v177
        %v182 = vpop.permute.xlu0 %181
        %v185 = vperm.slane %v178, 0
        %v187 = vmul.f32 %v182, %v185
        %v188 = vand.u32 2147483647, %v187
        %vm189 = vcmp.le.f32.partialorder %v188, 0.7853982
        %vm190 = vcmp.lt.s32.totalorder %v187, 0
        %v191 = vand.u32 %v187, 2139095040
        %v192 = vshrl.u32 %v191, 23
        %v193 = vsub.s32 %v192, 127
        %v194 = vand.u32 2147483647, %v187
        %v195 = vand.u32 %v194, 8388607
        %v196 = vor.u32 %v195, 8388608
        %v197 = vsub.s32 0, %v196
        %v198 = vadd.s32 %v193, 1
        %vm199 = vcmp.gt.s32.totalorder %v198, 0
        %v200 = vsel %vm199, %v198, 0
        %v201 = vshrl.u32 %v200, 5
        %v202 = vand.u32 %v200, 31
        %v203 = vsub.s32 32, %v202
        %v204 = vshrl.u32 683565275, %v203
        %v205 = vshll.u32 683565275, %v202
        %v206 = vshrl.u32 2475754826, %v203
        %v207 = vor.u32 %v205, %v206
        %v208 = vshll.u32 2475754826, %v202
        %v209 = vshrl.u32 2131351028, %v203
        %v210 = vor.u32 %v208, %v209
        %v211 = vshll.u32 2131351028, %v202
        %v212 = vshrl.u32 2102212464, %v203
        %v213 = vor.u32 %v211, %v212
        %v214 = vshll.u32 2102212464, %v202
        %v215 = vshrl.u32 920167782, %v203
        %v216 = vor.u32 %v214, %v215
        %v217 = vshll.u32 920167782, %v202
        %v218 = vshrl.u32 1326507024, %v203
        %v219 = vor.u32 %v217, %v218
        %vm220 = vcmp.lt.s32.totalorder %v201, 1
        %vm221 = vcmp.lt.s32.totalorder %v201, 2
        %vm222 = vcmp.lt.s32.totalorder %v201, 3
        %vm223 = vcmp.lt.s32.totalorder %v201, 4
        %v224 = vsel %vm220, %v204, %v207
        %v225 = vsel %vm223, %v213, 2102212464
        %v226 = vsel %vm222, %v210, %v225
        %v227 = vsel %vm221, %v224, %v226
        %v228 = vsel %vm220, %v207, %v210
        %v229 = vsel %vm223, %v216, 920167782
        %v230 = vsel %vm222, %v213, %v229
        %v231 = vsel %vm221, %v228, %v230
        %v232 = vsel %vm220, %v210, %v213
        %v233 = vsel %vm223, %v219, 1326507024
        %v234 = vsel %vm222, %v216, %v233
        %v235 = vsel %vm221, %v232, %v234
        %v236 = vshll.u32 %v196, 8
        %v237 = vand.u32 %v236, 65535
        %v238 = vshrl.u32 %v236, 16
        %v239 = vand.u32 %v235, 65535
        %v240 = vshrl.u32 %v235, 16
        %v241 = vmul.u32 %v237, %v239
        %v242 = vmul.u32 %v237, %v240
        %v243 = vmul.u32 %v238, %v239
        %v244 = vmul.u32 %v238, %v240
        %v245 = vshll.u32 %v242, 16
        %v246 = vshrl.u32 %v242, 16
        %v247 = vshll.u32 %v243, 16
        %v248 = vshrl.u32 %v243, 16
        %vm249 = vc.u32 %v241, %v245
        %v250 = vsel %vm249, 1, 0
        %v251 = vadd.s32 %v241, %v245
        %v252 = vadd.s32 %v244, %v250
        %vm253 = vc.u32 %v251, %v247
        %v254 = vsel %vm253, 1, 0
        %v255 = vadd.s32 %v251, %v247
        %v256 = vadd.s32 %v252, %v254
        %v257 = vadd.s32 %v256, %v246
        %v258 = vadd.s32 %v257, %v248
        %v259 = vand.u32 %v236, 65535
        %v260 = vshrl.u32 %v236, 16
        %v261 = vand.u32 %v231, 65535
        %v262 = vshrl.u32 %v231, 16
        %v263 = vmul.u32 %v259, %v261
        %v264 = vmul.u32 %v259, %v262
        %v265 = vmul.u32 %v260, %v261
        %v266 = vmul.u32 %v260, %v262
        %v267 = vshll.u32 %v264, 16
        %v268 = vshrl.u32 %v264, 16
        %v269 = vshll.u32 %v265, 16
        %v270 = vshrl.u32 %v265, 16
        %vm271 = vc.u32 %v263, %v267
        %v272 = vsel %vm271, 1, 0
        %v273 = vadd.s32 %v263, %v267
        %v274 = vadd.s32 %v266, %v272
        %vm275 = vc.u32 %v273, %v269
        %v276 = vsel %vm275, 1, 0
        %v277 = vadd.s32 %v273, %v269
        %v278 = vadd.s32 %v274, %v276
        %v279 = vadd.s32 %v278, %v268
        %v280 = vadd.s32 %v279, %v270
        %v281 = vmul.u32 %v236, %v227
        %v282 = vadd.s32 %v258, %v277
        %vm283 = vc.u32 %v258, %v277
        %v284 = vadd.s32 %v280, 1
        %v285 = vsel %vm283, %v284, %v280
        %v286 = vadd.s32 %v281, %v285
        %v287 = vadd.s32 %v286, 536870912
        %v288 = vshrl.u32 %v287, 30
        %v289 = vshll.u32 %v288, 30
        %v290 = vsub.s32 %v286, %v289
        %vm291 = vcmp.lt.s32.totalorder %v290, 0
        %v292 = vsub.s32 0, %v290
        %v293 = vsel %vm291, %v292, %v290
        %v294 = vclz %v293
        %v295 = vsub.s32 %v294, 2
        %vm296 = vcmp.gt.s32.totalorder 0, %v295
        %v297 = vsel %vm296, 0, %v295
        %v298 = vsub.s32 32, %v297
        %v299 = vshll.u32 %v290, %v297
        %v300 = vshrl.u32 %v282, %v298
        %v301 = vor.u32 %v299, %v300
        %v302 = vsub.s32 4294967266, %v297
        %v303 = vadd.s32 %v302, 127
        %v304 = vshll.u32 %v303, 23
        %v305 = vor.u32 4788187, %v304
        %v306 = vand.u32 2147483647, %v305
        %v308 = vcvt.s32.f32 %v301
        %v309 = vmul.f32 %v308, %v306
        %v310 = vxor.u32 %v309, 2147483648
        %v311 = vsel %vm190, %v310, %v309
        %v312 = vsub.s32 4, %v288
        %v313 = vsel %vm190, %v312, %v288
        %v314 = vsel %vm189, %v187, %v311
        %v315 = vsel %vm189, 0, %v313
        %v316 = vmul.f32 %v314, %v314
        %v317 = vmul.f32 %v316, -0.001358992
        %v318 = vadd.f32 %v317, 0.041655596
        %v319 = vmul.f32 %v316, %v318
        %v320 = vadd.f32 %v319, -0.4999988
        %v321 = vmul.f32 %v316, %v320
        %v322 = vadd.f32 1.0, %v321
        %v323 = vmul.f32 %v314, %v314
        %v324 = vmul.f32 %v323, -0.00019511016
        %v325 = vadd.f32 %v324, 0.008332121
        %v326 = vmul.f32 %v323, %v325
        %v327 = vadd.f32 %v326, -0.16666654
        %v328 = vmul.f32 %v323, %v327
        %v329 = vadd.f32 %v328, 1.0
        %v330 = vmul.f32 %v329, %v314
        %vm331 = vweird.f32 %v187
        %v332 = vand.u32 %v315, 3
        %vm333 = vcmp.lt.s32.totalorder %v332, 2
        %vm334 = vcmp.eq.s32.totalorder %v332, 0
        %v335 = vxor.u32 %v330, 2147483648
        %v336 = vsel %vm334, %v322, %v335
        %vm337 = vcmp.eq.s32.totalorder %v332, 2
        %v338 = vxor.u32 %v322, 2147483648
        %v339 = vsel %vm337, %v338, %v330
        %v340 = vsel %vm333, %v336, %v339
        %v341 = vsel %vm331, nan, %v340
        %v342 = vand.u32 2147483647, %v187
        %vm343 = vcmp.le.f32.partialorder %v342, 0.7853982
        %vm344 = vcmp.lt.s32.totalorder %v187, 0
        %v345 = vand.u32 %v187, 2139095040
        %v346 = vshrl.u32 %v345, 23
        %v347 = vsub.s32 %v346, 127
        %v348 = vand.u32 2147483647, %v187
        %v349 = vand.u32 %v348, 8388607
        %v350 = vor.u32 %v349, 8388608
        %v351 = vsub.s32 0, %v350
        %v352 = vadd.s32 %v347, 1
        %vm353 = vcmp.gt.s32.totalorder %v352, 0
        %v354 = vsel %vm353, %v352, 0
        %v355 = vshrl.u32 %v354, 5
        %v356 = vand.u32 %v354, 31
        %v357 = vsub.s32 32, %v356
        %v358 = vshrl.u32 683565275, %v357
        %v359 = vshll.u32 683565275, %v356
        %v360 = vshrl.u32 2475754826, %v357
        %v361 = vor.u32 %v359, %v360
        %v362 = vshll.u32 2475754826, %v356
        %v363 = vshrl.u32 2131351028, %v357
        %v364 = vor.u32 %v362, %v363
        %v365 = vshll.u32 2131351028, %v356
        %v366 = vshrl.u32 2102212464, %v357
        %v367 = vor.u32 %v365, %v366
        %v368 = vshll.u32 2102212464, %v356
        %v369 = vshrl.u32 920167782, %v357
        %v370 = vor.u32 %v368, %v369
        %v371 = vshll.u32 920167782, %v356
        %v372 = vshrl.u32 1326507024, %v357
        %v373 = vor.u32 %v371, %v372
        %vm374 = vcmp.lt.s32.totalorder %v355, 1
        %vm375 = vcmp.lt.s32.totalorder %v355, 2
        %vm376 = vcmp.lt.s32.totalorder %v355, 3
        %vm377 = vcmp.lt.s32.totalorder %v355, 4
        %v378 = vsel %vm374, %v358, %v361
        %v379 = vsel %vm377, %v367, 2102212464
        %v380 = vsel %vm376, %v364, %v379
        %v381 = vsel %vm375, %v378, %v380
        %v382 = vsel %vm374, %v361, %v364
        %v383 = vsel %vm377, %v370, 920167782
        %v384 = vsel %vm376, %v367, %v383
        %v385 = vsel %vm375, %v382, %v384
        %v386 = vsel %vm374, %v364, %v367
        %v387 = vsel %vm377, %v373, 1326507024
        %v388 = vsel %vm376, %v370, %v387
        %v389 = vsel %vm375, %v386, %v388
        %v390 = vshll.u32 %v350, 8
        %v391 = vand.u32 %v390, 65535
        %v392 = vshrl.u32 %v390, 16
        %v393 = vand.u32 %v389, 65535
        %v394 = vshrl.u32 %v389, 16
        %v395 = vmul.u32 %v391, %v393
        %v396 = vmul.u32 %v391, %v394
        %v397 = vmul.u32 %v392, %v393
        %v398 = vmul.u32 %v392, %v394
        %v399 = vshll.u32 %v396, 16
        %v400 = vshrl.u32 %v396, 16
        %v401 = vshll.u32 %v397, 16
        %v402 = vshrl.u32 %v397, 16
        %vm403 = vc.u32 %v395, %v399
        %v404 = vsel %vm403, 1, 0
        %v405 = vadd.s32 %v395, %v399
        %v406 = vadd.s32 %v398, %v404
        %vm407 = vc.u32 %v405, %v401
        %v408 = vsel %vm407, 1, 0
        %v409 = vadd.s32 %v405, %v401
        %v410 = vadd.s32 %v406, %v408
        %v411 = vadd.s32 %v410, %v400
        %v412 = vadd.s32 %v411, %v402
        %v413 = vand.u32 %v390, 65535
        %v414 = vshrl.u32 %v390, 16
        %v415 = vand.u32 %v385, 65535
        %v416 = vshrl.u32 %v385, 16
        %v417 = vmul.u32 %v413, %v415
        %v418 = vmul.u32 %v413, %v416
        %v419 = vmul.u32 %v414, %v415
        %v420 = vmul.u32 %v414, %v416
        %v421 = vshll.u32 %v418, 16
        %v422 = vshrl.u32 %v418, 16
        %v423 = vshll.u32 %v419, 16
        %v424 = vshrl.u32 %v419, 16
        %vm425 = vc.u32 %v417, %v421
        %v426 = vsel %vm425, 1, 0
        %v427 = vadd.s32 %v417, %v421
        %v428 = vadd.s32 %v420, %v426
        %vm429 = vc.u32 %v427, %v423
        %v430 = vsel %vm429, 1, 0
        %v431 = vadd.s32 %v427, %v423
        %v432 = vadd.s32 %v428, %v430
        %v433 = vadd.s32 %v432, %v422
        %v434 = vadd.s32 %v433, %v424
        %v435 = vmul.u32 %v390, %v381
        %v436 = vadd.s32 %v412, %v431
        %vm437 = vc.u32 %v412, %v431
        %v438 = vadd.s32 %v434, 1
        %v439 = vsel %vm437, %v438, %v434
        %v440 = vadd.s32 %v435, %v439
        %v441 = vadd.s32 %v440, 536870912
        %v442 = vshrl.u32 %v441, 30
        %v443 = vshll.u32 %v442, 30
        %v444 = vsub.s32 %v440, %v443
        %vm445 = vcmp.lt.s32.totalorder %v444, 0
        %v446 = vsub.s32 0, %v444
        %v447 = vsel %vm445, %v446, %v444
        %v448 = vclz %v447
        %v449 = vsub.s32 %v448, 2
        %vm450 = vcmp.gt.s32.totalorder 0, %v449
        %v451 = vsel %vm450, 0, %v449
        %v452 = vsub.s32 32, %v451
        %v453 = vshll.u32 %v444, %v451
        %v454 = vshrl.u32 %v436, %v452
        %v455 = vor.u32 %v453, %v454
        %v456 = vsub.s32 4294967266, %v451
        %v457 = vadd.s32 %v456, 127
        %v458 = vshll.u32 %v457, 23
        %v459 = vor.u32 4788187, %v458
        %v460 = vand.u32 2147483647, %v459
        %v462 = vcvt.s32.f32 %v455
        %v463 = vmul.f32 %v462, %v460
        %v464 = vxor.u32 %v463, 2147483648
        %v465 = vsel %vm344, %v464, %v463
        %v466 = vsub.s32 4, %v442
        %v467 = vsel %vm344, %v466, %v442
        %v468 = vsel %vm343, %v187, %v465
        %v469 = vsel %vm343, 0, %v467
        %v470 = vmul.f32 %v468, %v468
        %v471 = vmul.f32 %v470, -0.001358992
        %v472 = vadd.f32 %v471, 0.041655596
        %v473 = vmul.f32 %v470, %v472
        %v474 = vadd.f32 %v473, -0.4999988
        %v475 = vmul.f32 %v470, %v474
        %v476 = vadd.f32 1.0, %v475
        %v477 = vmul.f32 %v468, %v468
        %v478 = vmul.f32 %v477, -0.00019511016
        %v479 = vadd.f32 %v478, 0.008332121
        %v480 = vmul.f32 %v477, %v479
        %v481 = vadd.f32 %v480, -0.16666654
        %v482 = vmul.f32 %v477, %v481
        %v483 = vadd.f32 %v482, 1.0
        %v484 = vmul.f32 %v483, %v468
        %vm485 = vweird.f32 %v187
        %v486 = vadd.s32 %v469, 3
        %v487 = vand.u32 %v486, 3
        %vm488 = vcmp.lt.s32.totalorder %v487, 2
        %vm489 = vcmp.eq.s32.totalorder %v487, 0
        %v490 = vxor.u32 %v484, 2147483648
        %v491 = vsel %vm489, %v476, %v490
        %vm492 = vcmp.eq.s32.totalorder %v487, 2
        %v493 = vxor.u32 %v476, 2147483648
        %v494 = vsel %vm492, %v493, %v484
        %v495 = vsel %vm488, %v491, %v494
        %v496 = vsel %vm485, nan, %v495
        %498 = vrot.lane.b32.xlu0 %v341, 64
        %v499 = vpop.permute.xlu0 %498
        %vm501 = vcmask 523264
        %v502 = vsel %vm501, %v341, %v499
        %v503 = vpack.c.bf16 %v502, %v502
        %504 = vst [vmem:[%s165] sm:$0xf] %v503
        %506 = vrot.lane.b32.xlu0 %v496, 64
        %v507 = vpop.permute.xlu0 %506
        %v509 = vsel %vm501, %v496, %v507
        %v510 = vpack.c.bf16 %v509, %v509
        %511 = vst [vmem:[%s172] sm:$0xf] %v510
        %s512 = sand.u32 %s76, 1
        %s513 = scalar_lea.sflag [#allocation3], %s512
        %s514 = sand.u32 %s76, 1
        %s515 = smul.addr %s514, 4
        %s516 = scalar_lea.vmem [#allocation2], %s515
        %s517 = sand.u32 %s102, 1
        %s518 = scalar_lea.sflag [#allocation5], %s517
        %s519 = sand.u32 %s102, 1
        %s520 = smul.addr %s519, 4
        %s521 = scalar_lea.vmem [#allocation4], %s520
        // Predicated region
        $region29: #{tpu_custom_call.1} parent=27 // pred_check
          %p522 = pneg %p86
        $region30: #{tpu_custom_call.1} parent=27 // pred_check_branch
          %524 = sbr.rel (%p522) target = $region32
        $region31: #{tpu_custom_call.1} parent=27 // pred_region
          %526 = vsyncadd %s513, 0
          %s527 = smul.addr %s21, 4
          %s528 = scalar_lea.hbm %s2, %s527
          %s530 = sshll.u32 %s516, 4
          %s531 = int_to_ptr.vmem [resolvable:$true] %s530
          %s532 = sshll.u32 %s528, 4
          %s533 = int_to_ptr.hbm [resolvable:$true] %s532
          %535 = dma.vmem_to_hbm [thread:$0]  %s531, 64, %s533, %s513
        $region32: #{tpu_custom_call.1} parent=27 // pred_fallthru
          _
        // Predicated region
        $region33: #{tpu_custom_call.1} parent=27 // pred_check
          %p536 = pneg %p112
        $region34: #{tpu_custom_call.1} parent=27 // pred_check_branch
          %538 = sbr.rel (%p536) target = $region36
        $region35: #{tpu_custom_call.1} parent=27 // pred_region
          %540 = vsyncadd %s518, 0
          %s541 = smul.addr %s21, 4
          %s542 = scalar_lea.hbm %s3, %s541
          %s544 = sshll.u32 %s521, 4
          %s545 = int_to_ptr.vmem [resolvable:$true] %s544
          %s546 = sshll.u32 %s542, 4
          %s547 = int_to_ptr.hbm [resolvable:$true] %s546
          %549 = dma.vmem_to_hbm [thread:$0]  %s545, 64, %s547, %s518
        $region36: #{tpu_custom_call.1} parent=27 // pred_fallthru
          _
      $region28: #{tpu_custom_call.1} parent=5 // pred_fallthru
        _
      %p550 = scmp.le.s32.totalorder 2, %s16
      // Predicated region
      $region37: #{tpu_custom_call.1} parent=5 // pred_check
        %p551 = pneg %p550
      $region38: #{tpu_custom_call.1} parent=5 // pred_check_branch
        %553 = sbr.rel (%p551) target = $region40
      $region39: #{tpu_custom_call.1} parent=5 // pred_region
        %s554 = ssub.s32 %s16, 2
        // Predicated region
        $region41: #{tpu_custom_call.1} parent=39 // pred_check
          %p555 = pneg %p92
        $region42: #{tpu_custom_call.1} parent=39 // pred_check_branch
          %557 = sbr.rel (%p555) target = $region44
        $region43: #{tpu_custom_call.1} parent=39 // pred_region
          %s558 = sand.u32 %s77, 1
          %s559 = scalar_lea.sflag [#allocation3], %s558
          %s560 = sand.u32 %s77, 1
          %s561 = smul.addr %s560, 4
          %s562 = scalar_lea.vmem [#allocation2], %s561
          %564 = dma.done %s559, 64
        $region44: #{tpu_custom_call.1} parent=39 // pred_fallthru
          _
        // Predicated region
        $region45: #{tpu_custom_call.1} parent=39 // pred_check
          %p565 = pneg %p118
        $region46: #{tpu_custom_call.1} parent=39 // pred_check_branch
          %567 = sbr.rel (%p565) target = $region48
        $region47: #{tpu_custom_call.1} parent=39 // pred_region
          %s568 = sand.u32 %s103, 1
          %s569 = scalar_lea.sflag [#allocation5], %s568
          %s570 = sand.u32 %s103, 1
          %s571 = smul.addr %s570, 4
          %s572 = scalar_lea.vmem [#allocation4], %s571
          %574 = dma.done %s569, 64
        $region48: #{tpu_custom_call.1} parent=39 // pred_fallthru
          _
      $region40: #{tpu_custom_call.1} parent=5 // pred_fallthru
        _
    $region6: #{tpu_custom_call.1} parent=1 // loop_footer
      %s20 = sadd.s32 1, %s16
    $region7: #{tpu_custom_call.1} parent=1 // loop_footer_branch
      %15 = sbr.rel target = $region3
    $region8: #{tpu_custom_call.1} parent=1 // loop_exit
      _
    %575 = vsyncpa [#allocation3], 1
    %s576 = scalar_lea.sflag [#allocation3], 1
    %577 = vsyncpa %s576, 1
    %578 = vsyncpa [#allocation5], 1
    %s579 = scalar_lea.sflag [#allocation5], 1
    %580 = vsyncpa %s579, 1

</llo_original>
